<compile_context>
chip_gen: v7x
topology: tpu7x:2x2x1
jax: 0.10.0
libtpu: 0.0.40
codegen_flags: <defaults>
</compile_context>

<pallas_src>
import functools

import jax
import jax.numpy as jnp
from jax.experimental import pallas as pl
from jax.experimental.pallas import tpu as pltpu


def _round_up(x, m):
    return (x + m - 1) // m * m


# ----------------------------------------------------------------------------
# Pallas kernel: one (batch, time-tile) block of the causal dilated conv.
# ----------------------------------------------------------------------------
def _causal_conv1d_kernel(x_ref, halo_ref, w_ref, b_ref, o_ref, win_ref, *,
                          K, dilation, TL, P):
    # Stage halo + tile into one contiguous (P + TL, Cin) VMEM window
    # (persistent scratch writes instead of a concatenate every step).
    if P > 0:
        win_ref[0:P, :] = halo_ref[0, 0]
    win_ref[P:, :] = x_ref[0]

    # K dilated taps as MXU matmuls; f32 accumulation starts from tap 0 (no zeros init).
    # TODO(synk): for very small Cin, fold the K taps into a single
    # (TL, K*Cin) @ (K*Cin, Cout) im2col matmul to use more MXU contraction depth.
    acc = jnp.dot(win_ref[0:TL, :], w_ref[0], preferred_element_type=jnp.float32)
    for k in range(1, K):
        s = k * dilation
        acc = acc + jnp.dot(win_ref[s:s + TL, :], w_ref[k],
                            preferred_element_type=jnp.float32)

    o_ref[0] = (acc + b_ref[...]).astype(o_ref.dtype)


# ----------------------------------------------------------------------------
# Wrappers
# ----------------------------------------------------------------------------
def causal_conv1d_blc(x, w, b, *, dilation=1, tile_l=512,
                      compute_dtype=jnp.bfloat16):
    """Causal dilated conv.  x: (B, L, Cin) f32, w: (K, Cin, Cout), b: (1, Cout)."""
    B, L, cin = x.shape
    K, _, cout = w.shape
    P = (K - 1) * dilation

    # Time tile: multiple of 8 sublanes, capped so per-step VMEM stays small even for
    # long sequences (well under 32 MiB scoped default / v7x's 64 MiB physical).
    TL = _round_up(min(tile_l, _round_up(L, 8)), 8)
    Lp = _round_up(L, TL)          # pad L so it splits evenly into tiles
    nt = Lp // TL
    PH = P if P > 0 else 1         # halo block needs a non-zero dim even when P == 0

    xc = x.astype(compute_dtype)
    wc = w.astype(compute_dtype)
    bf = b.astype(jnp.float32)

    # Causal left pad + right pad up to a tile multiple (wrapper glue).
    xpad = jnp.pad(xc, ((0, 0), (P, 0), (0, Lp - L)))            # (B, P + Lp, Cin)
    x_tiles = xpad[:, P:, :]                                     # (B, Lp, Cin)
    # halo[b, l] = the P rows of xpad immediately preceding tile l.
    idx = jnp.arange(nt)[:, None] * TL + jnp.arange(PH)[None, :]
    halo = jnp.take(xpad, idx, axis=1)                           # (B, nt, PH, Cin)

    kernel = functools.partial(_causal_conv1d_kernel,
                               K=K, dilation=dilation, TL=TL, P=P)

    out = pl.pallas_call(
        kernel,
        out_shape=jax.ShapeDtypeStruct((B, Lp, cout), x.dtype),
        grid_spec=pltpu.PrefetchScalarGridSpec(
            num_scalar_prefetch=0,
            grid=(B, nt),
            in_specs=[
                pl.BlockSpec((1, TL, cin), lambda bi, li: (bi, li, 0)),        # tile
                pl.BlockSpec((1, 1, PH, cin), lambda bi, li: (bi, li, 0, 0)),  # causal halo
                pl.BlockSpec((K, cin, cout), lambda bi, li: (0, 0, 0)),        # weights (const)
                pl.BlockSpec((1, cout), lambda bi, li: (0, 0)),                # bias (const)
            ],
            out_specs=pl.BlockSpec((1, TL, cout), lambda bi, li: (bi, li, 0)),
            scratch_shapes=[pltpu.VMEM((TL + P, cin), compute_dtype)],
        ),
        compiler_params=pltpu.CompilerParams(
            dimension_semantics=("parallel", "parallel"),
            vmem_limit_bytes=48 * 1024 * 1024,
        ),
    )(x_tiles, halo, wc, bf)

    return out[:, :L, :]


def causal_conv1d(x_ncl, w, b, *, dilation=1, tile_l=512,
                  compute_dtype=jnp.bfloat16):
    """Matches CausalConv1d.forward: x_ncl is (B, Cin, L); returns (B, Cout, L)."""
    y = causal_conv1d_blc(jnp.transpose(x_ncl, (0, 2, 1)), w, b,
                          dilation=dilation, tile_l=tile_l,
                          compute_dtype=compute_dtype)
    return jnp.transpose(y, (0, 2, 1))


# ----------------------------------------------------------------------------
# Deterministic parameter init (weight_norm reparametrization done in JAX glue)
# ----------------------------------------------------------------------------
def init_params(key, cin, cout, kernel_size, *, weight_norm=True):
    kv, kg, kb = jax.random.split(key, 3)
    # PyTorch Conv1d weight layout is (Cout, Cin, K); the kernel wants (K, Cin, Cout).
    v = 0.01 * jax.random.normal(kv, (cout, cin, kernel_size), jnp.float32)
    if weight_norm:
        g = 1.0 + 0.1 * jax.random.normal(kg, (cout,), jnp.float32)
        norm = jnp.sqrt(jnp.sum(v * v, axis=(1, 2), keepdims=True))
        v = g[:, None, None] * v / norm
    w = jnp.transpose(v, (2, 1, 0))
    b = 0.05 * jax.random.normal(kb, (1, cout), jnp.float32)
    return w, b


# ----------------------------------------------------------------------------
# Pure-JAX reference (same math, f32, no Pallas) for a correctness check
# ----------------------------------------------------------------------------
def causal_conv1d_ref(x_ncl, w, b, *, dilation=1):
    x = jnp.transpose(x_ncl, (0, 2, 1))
    K = w.shape[0]
    L = x.shape[1]
    P = (K - 1) * dilation
    xp = jnp.pad(x, ((0, 0), (P, 0), (0, 0)))
    acc = b
    for k in range(K):
        s = k * dilation
        acc = acc + jnp.einsum("blc,cd->bld", xp[:, s:s + L, :], w[k])
    return jnp.transpose(acc, (0, 2, 1))


if __name__ == "__main__":
    B, Cin, Cout, L = 2, 4, 8, 16
    kernel_size, dilation = 3, 2          # stride = 1, groups = 1 (module defaults)

    key = jax.random.PRNGKey(0)
    kx, kp = jax.random.split(key)
    x = jax.random.normal(kx, (B, Cin, L), jnp.float32)   # NCL, like the PyTorch module
    w, b = init_params(kp, Cin, Cout, kernel_size, weight_norm=True)

    out = causal_conv1d(x, w, b, dilation=dilation)
    out = jax.block_until_ready(out)

    ref = causal_conv1d_ref(x, w, b, dilation=dilation)
    assert out.shape == (B, Cout, L)
    # bf16 operands with f32 accumulation -> loosened tolerance vs the f32 reference.
    assert jnp.allclose(out, ref, atol=1e-2, rtol=1e-2), "Pallas kernel mismatch vs JAX reference"

    print("KERNEL_OK")
</pallas_src>

<mosaic_0001>
module attributes {stable_mosaic.version = 11 : i64} {
  func.func @_causal_conv1d_kernel(%arg0: i32, %arg1: i32, %arg2: memref<1x16x4xbf16, #tpu.memory_space<vmem>>, %arg3: memref<1x1x4x4xbf16, #tpu.memory_space<vmem>>, %arg4: memref<3x4x8xbf16, #tpu.memory_space<vmem>>, %arg5: memref<1x8xf32, #tpu.memory_space<vmem>>, %arg6: memref<1x16x8xf32, #tpu.memory_space<vmem>>, %arg7: memref<20x4xbf16, #tpu.memory_space<vmem>>) attributes {dimension_semantics = [#tpu.dimension_semantics<parallel>, #tpu.dimension_semantics<parallel>], iteration_bounds = array<i64: 2, 1>, scalar_prefetch = 0 : i64, scratch_operands = 1 : i64, tpu.core_type = #tpu.core_type<tc>, window_params = [{transform_indices = @transform_0, window_bounds = array<i64: 1, 16, 4>}, {transform_indices = @transform_1, window_bounds = array<i64: 1, 1, 4, 4>}, {pipeline_mode = #tpu.pipeline_mode<synchronous>, transform_indices = @transform_2, window_bounds = array<i64: 3, 4, 8>}, {pipeline_mode = #tpu.pipeline_mode<synchronous>, transform_indices = @transform_3, window_bounds = array<i64: 1, 8>}, {transform_indices = @transform_4, window_bounds = array<i64: 1, 16, 8>}]} {
    %c0 = arith.constant 0 : index
    %c0_0 = arith.constant 0 : index
    %c0_1 = arith.constant 0 : index
    %c0_2 = arith.constant 0 : index
    %0 = vector.load %arg3[%c0, %c0_0, %c0_1, %c0_2] : memref<1x1x4x4xbf16, #tpu.memory_space<vmem>>, vector<1x1x4x4xbf16>
    %1 = vector.shape_cast %0 : vector<1x1x4x4xbf16> to vector<4x4xbf16>
    %c0_3 = arith.constant 0 : index
    %c0_4 = arith.constant 0 : index
    %2 = vector.load %arg7[%c0_3, %c0_4] : memref<20x4xbf16, #tpu.memory_space<vmem>>, vector<4x4xbf16>
    tpu.vector_store %arg7[%c0_3, %c0_4], %1 {strides = array<i32>} : memref<20x4xbf16, #tpu.memory_space<vmem>>, vector<4x4xbf16>,
    %c0_5 = arith.constant 0 : index
    %c0_6 = arith.constant 0 : index
    %c0_7 = arith.constant 0 : index
    %3 = vector.load %arg2[%c0_5, %c0_6, %c0_7] : memref<1x16x4xbf16, #tpu.memory_space<vmem>>, vector<1x16x4xbf16>
    %4 = vector.shape_cast %3 : vector<1x16x4xbf16> to vector<16x4xbf16>
    %c4 = arith.constant 4 : index
    %c0_8 = arith.constant 0 : index
    %5 = vector.load %arg7[%c4, %c0_8] : memref<20x4xbf16, #tpu.memory_space<vmem>>, vector<16x4xbf16>
    tpu.vector_store %arg7[%c4, %c0_8], %4 {strides = array<i32>} : memref<20x4xbf16, #tpu.memory_space<vmem>>, vector<16x4xbf16>,
    %c0_9 = arith.constant 0 : index
    %c0_10 = arith.constant 0 : index
    %6 = vector.load %arg7[%c0_9, %c0_10] : memref<20x4xbf16, #tpu.memory_space<vmem>>, vector<16x4xbf16>
    %c0_11 = arith.constant 0 : index
    %c0_12 = arith.constant 0 : index
    %c0_13 = arith.constant 0 : index
    %7 = vector.load %arg4[%c0_11, %c0_12, %c0_13] : memref<3x4x8xbf16, #tpu.memory_space<vmem>>, vector<1x4x8xbf16>
    %8 = vector.shape_cast %7 : vector<1x4x8xbf16> to vector<4x8xbf16>
    %cst = arith.constant dense<0.000000e+00> : vector<16x8xf32>
    %9 = tpu.matmul %6, %8, %cst {dimension_numbers = #tpu.dot_dimension_numbers<[1], [0], [0], [1], [0, 0, 1, 1], [], []>} : vector<16x4xbf16>, vector<4x8xbf16>, vector<16x8xf32> -> vector<16x8xf32>
    %c2 = arith.constant 2 : index
    %c0_14 = arith.constant 0 : index
    %10 = vector.load %arg7[%c2, %c0_14] : memref<20x4xbf16, #tpu.memory_space<vmem>>, vector<16x4xbf16>
    %c1 = arith.constant 1 : index
    %c0_15 = arith.constant 0 : index
    %c0_16 = arith.constant 0 : index
    %11 = vector.load %arg4[%c1, %c0_15, %c0_16] : memref<3x4x8xbf16, #tpu.memory_space<vmem>>, vector<1x4x8xbf16>
    %12 = vector.shape_cast %11 : vector<1x4x8xbf16> to vector<4x8xbf16>
    %cst_17 = arith.constant dense<0.000000e+00> : vector<16x8xf32>
    %13 = tpu.matmul %10, %12, %cst_17 {dimension_numbers = #tpu.dot_dimension_numbers<[1], [0], [0], [1], [0, 0, 1, 1], [], []>} : vector<16x4xbf16>, vector<4x8xbf16>, vector<16x8xf32> -> vector<16x8xf32>
    %14 = arith.addf %9, %13 : vector<16x8xf32>
    %c4_18 = arith.constant 4 : index
    %c0_19 = arith.constant 0 : index
    %15 = vector.load %arg7[%c4_18, %c0_19] : memref<20x4xbf16, #tpu.memory_space<vmem>>, vector<16x4xbf16>
    %c2_20 = arith.constant 2 : index
    %c0_21 = arith.constant 0 : index
    %c0_22 = arith.constant 0 : index
    %16 = vector.load %arg4[%c2_20, %c0_21, %c0_22] : memref<3x4x8xbf16, #tpu.memory_space<vmem>>, vector<1x4x8xbf16>
    %17 = vector.shape_cast %16 : vector<1x4x8xbf16> to vector<4x8xbf16>
    %cst_23 = arith.constant dense<0.000000e+00> : vector<16x8xf32>
    %18 = tpu.matmul %15, %17, %cst_23 {dimension_numbers = #tpu.dot_dimension_numbers<[1], [0], [0], [1], [0, 0, 1, 1], [], []>} : vector<16x4xbf16>, vector<4x8xbf16>, vector<16x8xf32> -> vector<16x8xf32>
    %19 = arith.addf %14, %18 : vector<16x8xf32>
    %c0_24 = arith.constant 0 : index
    %c0_25 = arith.constant 0 : index
    %20 = vector.load %arg5[%c0_24, %c0_25] : memref<1x8xf32, #tpu.memory_space<vmem>>, vector<1x8xf32>
    %21 = vector.broadcast %20 : vector<1x8xf32> to vector<16x8xf32>
    %22 = arith.addf %19, %21 : vector<16x8xf32>
    %c0_26 = arith.constant 0 : index
    %c0_27 = arith.constant 0 : index
    %c0_28 = arith.constant 0 : index
    %23 = vector.load %arg6[%c0_26, %c0_27, %c0_28] : memref<1x16x8xf32, #tpu.memory_space<vmem>>, vector<1x16x8xf32>
    %24 = vector.shape_cast %23 : vector<1x16x8xf32> to vector<16x8xf32>
    %25 = vector.shape_cast %22 : vector<16x8xf32> to vector<1x16x8xf32>
    tpu.vector_store %arg6[%c0_26, %c0_27, %c0_28], %25 {strides = array<i32>} : memref<1x16x8xf32, #tpu.memory_space<vmem>>, vector<1x16x8xf32>,
    return
  }
  func.func @transform_0(%arg0: i32, %arg1: i32) -> (i32, i32, i32) {
    %c0_i32 = arith.constant 0 : i32
    %c0_i32_0 = arith.constant 0 : i32
    return %arg0, %arg1, %c0_i32 : i32, i32, i32
  }
  func.func @transform_1(%arg0: i32, %arg1: i32) -> (i32, i32, i32, i32) {
    %c0_i32 = arith.constant 0 : i32
    %c0_i32_0 = arith.constant 0 : i32
    %c0_i32_1 = arith.constant 0 : i32
    return %arg0, %arg1, %c0_i32, %c0_i32_0 : i32, i32, i32, i32
  }
  func.func @transform_2(%arg0: i32, %arg1: i32) -> (i32, i32, i32) {
    %c0_i32 = arith.constant 0 : i32
    %c0_i32_0 = arith.constant 0 : i32
    %c0_i32_1 = arith.constant 0 : i32
    %c0_i32_2 = arith.constant 0 : i32
    return %c0_i32, %c0_i32_0, %c0_i32_1 : i32, i32, i32
  }
  func.func @transform_3(%arg0: i32, %arg1: i32) -> (i32, i32) {
    %c0_i32 = arith.constant 0 : i32
    %c0_i32_0 = arith.constant 0 : i32
    %c0_i32_1 = arith.constant 0 : i32
    return %c0_i32, %c0_i32_0 : i32, i32
  }
  func.func @transform_4(%arg0: i32, %arg1: i32) -> (i32, i32, i32) {
    %c0_i32 = arith.constant 0 : i32
    %c0_i32_0 = arith.constant 0 : i32
    return %arg0, %arg1, %c0_i32 : i32, i32, i32
  }
}

</mosaic_0001>

<llo_original>
// kernel: tpu_custom_call.1
$region0: #{tpu_custom_call.1}
  #allocation0 [shape = 'u32[]', space=smem, size = 0x4, offset = 0x4, fixed_abs, tag = 'smem constant byte address 0x4 - core index']
  #allocation1 [shape = 'u32[144,128]{1,0:T(1,128)}', space=vmem, size = 0x12000, scoped, tag = 'internal scratch']
  #allocation2 [shape = 'bf16[20,4]{1,0:T(8,128)(2,1)}', space=vmem, size = 0x1800, scoped, tag = 'scratch operand']
  %s0 = inlined_call_operand.vmem [shape: bf16[2,16,4], index: 0, kind: input, shape index: {}]
  %s1 = inlined_call_operand.vmem [shape: bf16[2,1,4,4], index: 1, kind: input, shape index: {}]
  %s2 = inlined_call_operand.vmem [shape: bf16[3,4,8], index: 2, kind: input, shape index: {}]
  %s3 = inlined_call_operand.vmem [shape: f32[1,8], index: 3, kind: input, shape index: {}]
  %s4 = inlined_call_operand.vmem [shape: f32[2,16,8], index: 4, kind: output, shape index: {}]
  %s5 = sld [smem:[#allocation0]]
  $region49: #{tpu_custom_call.1} parent=0
    _
  %s7 = ssub.s32 1, %s5
  %s8 = scalar_select 0, %s7, %s5
  loop: start=0, step=1, limit=4
  $region2: #{tpu_custom_call.1} parent=0 // loop_pre_header
    _
  $region3: #{tpu_custom_call.1} parent=0 // loop_header
    %s10 = sphi 0, %s14
    %p11 = scmp.ge.s32.totalorder %s10, 4
    %s17 = sphi 0, %s29
    %s18 = sphi 0, %s25
    %s19 = sphi 0, %s17
    %s20 = sphi 0, %s18
    %s21 = sphi 0, %s19
    %s22 = sphi 0, %s20
    %s34 = sphi 0, %s36
    %s37 = sphi 0, %s34
    %s38 = sphi 0, %s37
    %s54 = sphi 0, %s38
    %s62 = sphi 0, %s64
    %s65 = sphi 0, %s62
    %s66 = sphi 0, %s65
    %s82 = sphi 0, %s66
    %s86 = sphi 0, %s86
    %s88 = sphi 0, %s86
    %s89 = sphi 0, %s88
    %s103 = sphi 0, %s89
    %s107 = sphi 0, %s107
    %s109 = sphi 0, %s107
    %s110 = sphi 0, %s109
    %s124 = sphi 0, %s110
    %s132 = sphi 0, %s134
    %s135 = sphi 0, %s132
    %s136 = sphi 0, %s135
    %s152 = sphi 0, %s136
  $region4: #{tpu_custom_call.1} parent=0 // loop_header_branch
    %13 = sbr.rel (%p11) target = $region8
  $region5: #{tpu_custom_call.1} parent=0 // loop_body
    %s15 = ssub.s32 %s10, 1
    %s16 = ssub.s32 %s10, 2
    %s23 = sadd.s32 1, %s18
    %p24 = scmp.ge.s32.totalorder %s23, 1
    %s25 = scalar_select %p24, 0, %s23
    %s26 = sadd.s32 1, %s17
    %s27 = scalar_select %p24, %s26, %s17
    %p28 = scmp.ge.s32.totalorder %s27, 2
    %s29 = scalar_select %p28, 0, %s27
    %s30 = ssub.s32 %s17, %s29
    %s31 = ssub.s32 %s18, %s25
    %s32 = sor.u32 %s30, %s31
    %p33 = scmp.eq.s32.totalorder %s32, 0
    %s35 = sadd.s32 %s34, 1
    %s36 = scalar_select %p33, %s34, %s35
    %p39 = pneg %p33
    %p40 = scmp.eq.s32.totalorder %s10, 1
    %p41 = por %p39, %p40
    %p42 = scmp.ne.s32.totalorder %s34, %s37
    %p43 = scmp.eq.s32.totalorder %s10, 0
    %p44 = por %p42, %p43
    %p45 = scmp.ne.s32.totalorder %s34, %s37
    %p46 = scmp.eq.s32.totalorder %s15, 1
    %p47 = por %p45, %p46
    %p48 = scmp.ne.s32.totalorder %s37, %s38
    %p49 = scmp.eq.s32.totalorder %s15, 0
    %p50 = por %p48, %p49
    %p51 = scmp.ne.s32.totalorder %s37, %s38
    %p52 = scmp.eq.s32.totalorder %s16, 1
    %p53 = por %p51, %p52
    %p55 = scmp.ne.s32.totalorder %s38, %s54
    %p56 = scmp.eq.s32.totalorder %s16, 0
    %p57 = por %p55, %p56
    %s58 = ssub.s32 %s17, %s29
    %s59 = ssub.s32 %s18, %s25
    %s60 = sor.u32 %s58, %s59
    %p61 = scmp.eq.s32.totalorder %s60, 0
    %s63 = sadd.s32 %s62, 1
    %s64 = scalar_select %p61, %s62, %s63
    %p67 = pneg %p61
    %p68 = scmp.eq.s32.totalorder %s10, 1
    %p69 = por %p67, %p68
    %p70 = scmp.ne.s32.totalorder %s62, %s65
    %p71 = scmp.eq.s32.totalorder %s10, 0
    %p72 = por %p70, %p71
    %p73 = scmp.ne.s32.totalorder %s62, %s65
    %p74 = scmp.eq.s32.totalorder %s15, 1
    %p75 = por %p73, %p74
    %p76 = scmp.ne.s32.totalorder %s65, %s66
    %p77 = scmp.eq.s32.totalorder %s15, 0
    %p78 = por %p76, %p77
    %p79 = scmp.ne.s32.totalorder %s65, %s66
    %p80 = scmp.eq.s32.totalorder %s16, 1
    %p81 = por %p79, %p80
    %p83 = scmp.ne.s32.totalorder %s66, %s82
    %p84 = scmp.eq.s32.totalorder %s16, 0
    %p85 = por %p83, %p84
    %s87 = sadd.s32 %s86, 1
    %p90 = scmp.eq.s32.totalorder %s10, 1
    %p91 = scmp.ne.s32.totalorder %s86, %s88
    %p92 = scmp.eq.s32.totalorder %s10, 0
    %p93 = por %p91, %p92
    %p94 = scmp.ne.s32.totalorder %s86, %s88
    %p95 = scmp.eq.s32.totalorder %s15, 1
    %p96 = por %p94, %p95
    %p97 = scmp.ne.s32.totalorder %s88, %s89
    %p98 = scmp.eq.s32.totalorder %s15, 0
    %p99 = por %p97, %p98
    %p100 = scmp.ne.s32.totalorder %s88, %s89
    %p101 = scmp.eq.s32.totalorder %s16, 1
    %p102 = por %p100, %p101
    %p104 = scmp.ne.s32.totalorder %s89, %s103
    %p105 = scmp.eq.s32.totalorder %s16, 0
    %p106 = por %p104, %p105
    %s108 = sadd.s32 %s107, 1
    %p111 = scmp.eq.s32.totalorder %s10, 1
    %p112 = scmp.ne.s32.totalorder %s107, %s109
    %p113 = scmp.eq.s32.totalorder %s10, 0
    %p114 = por %p112, %p113
    %p115 = scmp.ne.s32.totalorder %s107, %s109
    %p116 = scmp.eq.s32.totalorder %s15, 1
    %p117 = por %p115, %p116
    %p118 = scmp.ne.s32.totalorder %s109, %s110
    %p119 = scmp.eq.s32.totalorder %s15, 0
    %p120 = por %p118, %p119
    %p121 = scmp.ne.s32.totalorder %s109, %s110
    %p122 = scmp.eq.s32.totalorder %s16, 1
    %p123 = por %p121, %p122
    %p125 = scmp.ne.s32.totalorder %s110, %s124
    %p126 = scmp.eq.s32.totalorder %s16, 0
    %p127 = por %p125, %p126
    %s128 = ssub.s32 %s17, %s29
    %s129 = ssub.s32 %s18, %s25
    %s130 = sor.u32 %s128, %s129
    %p131 = scmp.eq.s32.totalorder %s130, 0
    %s133 = sadd.s32 %s132, 1
    %s134 = scalar_select %p131, %s132, %s133
    %p137 = pneg %p131
    %p138 = scmp.eq.s32.totalorder %s10, 1
    %p139 = por %p137, %p138
    %p140 = scmp.ne.s32.totalorder %s132, %s135
    %p141 = scmp.eq.s32.totalorder %s10, 0
    %p142 = por %p140, %p141
    %p143 = scmp.ne.s32.totalorder %s132, %s135
    %p144 = scmp.eq.s32.totalorder %s15, 1
    %p145 = por %p143, %p144
    %p146 = scmp.ne.s32.totalorder %s135, %s136
    %p147 = scmp.eq.s32.totalorder %s15, 0
    %p148 = por %p146, %p147
    %p149 = scmp.ne.s32.totalorder %s135, %s136
    %p150 = scmp.eq.s32.totalorder %s16, 1
    %p151 = por %p149, %p150
    %p153 = scmp.ne.s32.totalorder %s136, %s152
    %p154 = scmp.eq.s32.totalorder %s16, 0
    %p155 = por %p153, %p154
    %p156 = scmp.le.s32.totalorder 1, %s10
    %p157 = scmp.lt.s32.totalorder %s10, 3
    %p158 = pnand %p156, %p157
    %p159 = pneg %p158
    // Predicated region
    $region9: #{tpu_custom_call.1} parent=5 // pred_check
      _
    $region10: #{tpu_custom_call.1} parent=5 // pred_check_branch
      %161 = sbr.rel (%p158) target = $region12
    $region11: #{tpu_custom_call.1} parent=5 // pred_region
      %s162 = ssub.s32 %s10, 1
      // Predicated region
      $region13: #{tpu_custom_call.1} parent=11 // pred_check
        %p163 = pneg %p99
      $region14: #{tpu_custom_call.1} parent=11 // pred_check_branch
        %165 = sbr.rel (%p163) target = $region16
      $region15: #{tpu_custom_call.1} parent=11 // pred_region
        _
      $region16: #{tpu_custom_call.1} parent=11 // pred_fallthru
        _
      // Predicated region
      $region17: #{tpu_custom_call.1} parent=11 // pred_check
        %p166 = pneg %p120
      $region18: #{tpu_custom_call.1} parent=11 // pred_check_branch
        %168 = sbr.rel (%p166) target = $region20
      $region19: #{tpu_custom_call.1} parent=11 // pred_region
        _
      $region20: #{tpu_custom_call.1} parent=11 // pred_fallthru
        _
    $region12: #{tpu_custom_call.1} parent=5 // pred_fallthru
      _
    %p169 = scmp.lt.s32.totalorder %s10, 2
    // Predicated region
    $region21: #{tpu_custom_call.1} parent=5 // pred_check
      %p170 = pneg %p169
    $region22: #{tpu_custom_call.1} parent=5 // pred_check_branch
      %172 = sbr.rel (%p170) target = $region24
    $region23: #{tpu_custom_call.1} parent=5 // pred_region
      // Predicated region
      $region25: #{tpu_custom_call.1} parent=23 // pred_check
        %p173 = pneg %p44
      $region26: #{tpu_custom_call.1} parent=23 // pred_check_branch
        %175 = sbr.rel (%p173) target = $region28
      $region27: #{tpu_custom_call.1} parent=23 // pred_region
        %s176 = smul.u32 2, %s18
        %p177 = scmp.lt.s32.totalorder %s17, 1
        %s178 = scalar_select %p177, %s17, 1
        %p179 = scmp.lt.s32.totalorder %s176, 1
        %s180 = scalar_select %p179, %s176, 1
        %s181 = smul.addr %s178, 2
        %s182 = sadd.s32 %s180, %s181
        %s183 = smul.addr %s182, 4
        %s184 = scalar_lea.vmem %s0, %s183
        %s185 = smul.u32 2, %s18
      $region28: #{tpu_custom_call.1} parent=23 // pred_fallthru
        _
      // Predicated region
      $region29: #{tpu_custom_call.1} parent=23 // pred_check
        %p186 = pneg %p72
      $region30: #{tpu_custom_call.1} parent=23 // pred_check_branch
        %188 = sbr.rel (%p186) target = $region32
      $region31: #{tpu_custom_call.1} parent=23 // pred_region
        %p189 = scmp.lt.s32.totalorder %s17, 1
        %s190 = scalar_select %p189, %s17, 1
        %p191 = scmp.lt.s32.totalorder %s18, 0
        %s192 = scalar_select %p191, %s18, 0
        %s193 = sadd.s32 %s192, %s190
        %s194 = smul.addr %s193, 2
        %s195 = scalar_lea.vmem %s1, %s194
      $region32: #{tpu_custom_call.1} parent=23 // pred_fallthru
        _
    $region24: #{tpu_custom_call.1} parent=5 // pred_fallthru
      _
    %p196 = scmp.le.s32.totalorder 1, %s10
    %p197 = scmp.lt.s32.totalorder %s10, 3
    %p198 = pnand %p196, %p197
    %p199 = pneg %p198
    // Predicated region
    $region33: #{tpu_custom_call.1} parent=5 // pred_check
      _
    $region34: #{tpu_custom_call.1} parent=5 // pred_check_branch
      %201 = sbr.rel (%p198) target = $region36
    $region35: #{tpu_custom_call.1} parent=5 // pred_region
      %s202 = ssub.s32 %s10, 1
      %s203 = smul.u32 2, %s20
      %p204 = scmp.lt.s32.totalorder %s19, 1
      %s205 = scalar_select %p204, %s19, 1
      %p206 = scmp.lt.s32.totalorder %s203, 1
      %s207 = scalar_select %p206, %s203, 1
      %s208 = smul.addr %s205, 2
      %s209 = sadd.s32 %s207, %s208
      %s210 = smul.addr %s209, 4
      %s211 = scalar_lea.vmem %s0, %s210
      %p212 = pneg %p50
      %p213 = pneg %p47
      %p214 = scmp.lt.s32.totalorder %s19, 1
      %s215 = scalar_select %p214, %s19, 1
      %p216 = scmp.lt.s32.totalorder %s20, 0
      %s217 = scalar_select %p216, %s20, 0
      %s218 = sadd.s32 %s217, %s215
      %s219 = smul.addr %s218, 2
      %s220 = scalar_lea.vmem %s1, %s219
      %p221 = pneg %p78
      %p222 = pneg %p75
      %p223 = pneg %p99
      %p224 = pneg %p96
      %p225 = pneg %p120
      %p226 = pneg %p117
      %p227 = pneg %p148
      %p228 = pneg %p145
      %s229 = smul.u32 2, %s20
      %p230 = scmp.lt.s32.totalorder %s19, 1
      %s231 = scalar_select %p230, %s19, 1
      %p232 = scmp.lt.s32.totalorder %s229, 1
      %s233 = scalar_select %p232, %s229, 1
      %s234 = smul.addr %s231, 2
      %s235 = sadd.s32 %s233, %s234
      %s236 = smul.addr %s235, 8
      %s237 = scalar_lea.vmem %s4, %s236
      %s238 = smul.u32 2, %s20
      %p239 = scmp.lt.s32.totalorder %s19, 1
      %s240 = scalar_select %p239, %s19, 1
      %p241 = scmp.lt.s32.totalorder %s238, 1
      %s242 = scalar_select %p241, %s238, 1
      %s243 = smul.addr %s240, 2
      %s244 = sadd.s32 %s242, %s243
      %s245 = smul.addr %s244, 4
      %s246 = scalar_lea.vmem %s0, %s245
      %s247 = smul.u32 2, %s20
      %p248 = scmp.lt.s32.totalorder %s19, 1
      %s249 = scalar_select %p248, %s19, 1
      %p250 = scmp.lt.s32.totalorder %s20, 0
      %s251 = scalar_select %p250, %s20, 0
      %s252 = sadd.s32 %s251, %s249
      %s253 = smul.addr %s252, 2
      %s254 = scalar_lea.vmem %s1, %s253
      %s255 = smul.u32 2, %s20
      %p256 = scmp.lt.s32.totalorder %s19, 1
      %s257 = scalar_select %p256, %s19, 1
      %p258 = scmp.lt.s32.totalorder %s255, 1
      %s259 = scalar_select %p258, %s255, 1
      %s260 = smul.addr %s257, 2
      %s261 = sadd.s32 %s259, %s260
      %s262 = smul.addr %s261, 8
      %s263 = scalar_lea.vmem %s4, %s262
      %s264 = smul.u32 2, %s20
      %v266 = vld [vmem:[%s254] sm:$0x3]
      %vm267 = vcmask 25600
      %268 = vst.msk [vmem:[#allocation2] sm:$0x3] %vm267, %v266
      %v269 = vld [vmem:[%s246] sm:$0xf]
      %v270 = vld [vmem:[%s246 + $0x4] sm:$0xf]
      %vm273 = vcmask 1041408
      %vm274 = vcmask 1045508
      %vm275 = vmor %vm273, %vm274
      %v276 = vrot.slane %v269, 6
      %v277 = vrot.slane %v276, 4
      %v278 = vrot.slane %v270, 6
      %v279 = vsel %vm275, %v277, %v278
      %v280 = vrot.slane %v278, 4
      %vm284 = vcmask 27650
      %285 = vst.msk [vmem:[#allocation2] sm:$0xc] %vm284, %v276
      %vm286 = vcmask 27648
      %287 = vst.msk [vmem:[#allocation2 + $0x4] sm:$0xf] %vm286, %v279
      %288 = vst.msk [vmem:[#allocation2 + $0x8] sm:$0x3] %vm267, %v280
      %v289 = vld [vmem:[#allocation2] sm:$0xf]
      %v290 = vld [vmem:[#allocation2 + $0x4] sm:$0xf]
      %v291 = vld [vmem:[%s2] sm:$0x3]
      %v292 = vld [vmem:[#allocation2] sm:$0xe]
      %v293 = vld [vmem:[#allocation2 + $0x8] sm:$0x1]
      %s294 = scalar_lea.vmem %s2, 2
      %v295 = vld [vmem:[%s294] sm:$0x3]
      %v299 = vunpack.c.l.b16 %v292
      %v300 = vunpack.c.l.b16 %v290
      %v301 = vunpack.c.l.b16 %v293
      %v302 = vpack.c.b16 %v300, %v299
      %v303 = vpack.c.b16 %v301, %v301
      %vm304 = vcmask 1046528
      %v305 = vrot.slane %v302, 1
      %v306 = vrot.slane %v303, 1
      %v307 = vsel %vm304, %v305, %v306
      %vm308 = vcmask 31744
      %v310 = vsel %vm308, %v307, 0
      %vm312 = vcmask 1041408
      %v314 = vsel %vm312, %v295, 0
      %316 = vmatprep.subr.bf16.mxu0 0
      %317 = vmatpush1.bf16.msra.mxu0 %v314
      %318 = vmatprep.subr.bf16.mxu0 0
      %319 = vmatpush1.bf16.msra.mxu0 0
      %320 = vmatprep.subr.bf16.mxu0 0
      %321 = vmatpush1.bf16.msra.mxu0 0
      %322 = vmatprep.subr.bf16.mxu0 0
      %323 = vmatpush1.bf16.msra.mxu0 0
      %324 = vmatprep.subr.bf16.mxu0 0
      %325 = vmatpush1.bf16.msra.mxu0 0
      %326 = vmatprep.subr.bf16.mxu0 0
      %327 = vmatpush1.bf16.msra.mxu0 0
      %328 = vmatprep.subr.bf16.mxu0 0
      %329 = vmatpush1.bf16.msra.mxu0 0
      %330 = vmatprep.subr.bf16.mxu0 0
      %331 = vmatpush1.bf16.msra.mxu0 0
      %332 = vmatprep.subr.bf16.mxu0 0
      %333 = vmatpush1.bf16.msra.mxu0 0
      %334 = vmatprep.subr.bf16.mxu0 0
      %335 = vmatpush1.bf16.msra.mxu0 0
      %336 = vmatprep.subr.bf16.mxu0 0
      %337 = vmatpush1.bf16.msra.mxu0 0
      %338 = vmatprep.subr.bf16.mxu0 0
      %339 = vmatpush1.bf16.msra.mxu0 0
      %340 = vmatprep.subr.bf16.mxu0 0
      %341 = vmatpush1.bf16.msra.mxu0 0
      %342 = vmatprep.subr.bf16.mxu0 0
      %343 = vmatpush1.bf16.msra.mxu0 0
      %344 = vmatprep.subr.bf16.mxu0 0
      %345 = vmatpush1.bf16.msra.mxu0 0
      %346 = vmatprep.subr.bf16.mxu0 0
      %347 = vmatpush1.bf16.msra.mxu0 0
      %348 = vmatprep.mubr.bf16.mxu0 0
      %349 = vmatmul.mubr.bf16.gmra.mrb[0].mxu0 %v310
      %v350 = vpop.f32.mrb[0].mxu0
      %v351 = vadd.f32 0.0, %v350
      %v352 = vpop.f32.mrb[0].mxu0
      %v353 = vpop.f32.mrb[0].mxu0
      %v354 = vadd.f32 0.0, %v353
      %v355 = vpop.f32.mrb[0].mxu0
      %356 = vdwg.mxu0
      %v358 = vunpack.c.l.b16 %v289
      %v359 = vpack.c.b16 %v300, %v358
      %v361 = vsel %vm308, %v359, 0
      %v364 = vsel %vm312, %v291, 0
      %366 = vmatprep.subr.bf16.mxu0 0
      %367 = vmatpush1.bf16.msra.mxu0 %v364
      %368 = vmatprep.subr.bf16.mxu0 0
      %369 = vmatpush1.bf16.msra.mxu0 0
      %370 = vmatprep.subr.bf16.mxu0 0
      %371 = vmatpush1.bf16.msra.mxu0 0
      %372 = vmatprep.subr.bf16.mxu0 0
      %373 = vmatpush1.bf16.msra.mxu0 0
      %374 = vmatprep.subr.bf16.mxu0 0
      %375 = vmatpush1.bf16.msra.mxu0 0
      %376 = vmatprep.subr.bf16.mxu0 0
      %377 = vmatpush1.bf16.msra.mxu0 0
      %378 = vmatprep.subr.bf16.mxu0 0
      %379 = vmatpush1.bf16.msra.mxu0 0
      %380 = vmatprep.subr.bf16.mxu0 0
      %381 = vmatpush1.bf16.msra.mxu0 0
      %382 = vmatprep.subr.bf16.mxu0 0
      %383 = vmatpush1.bf16.msra.mxu0 0
      %384 = vmatprep.subr.bf16.mxu0 0
      %385 = vmatpush1.bf16.msra.mxu0 0
      %386 = vmatprep.subr.bf16.mxu0 0
      %387 = vmatpush1.bf16.msra.mxu0 0
      %388 = vmatprep.subr.bf16.mxu0 0
      %389 = vmatpush1.bf16.msra.mxu0 0
      %390 = vmatprep.subr.bf16.mxu0 0
      %391 = vmatpush1.bf16.msra.mxu0 0
      %392 = vmatprep.subr.bf16.mxu0 0
      %393 = vmatpush1.bf16.msra.mxu0 0
      %394 = vmatprep.subr.bf16.mxu0 0
      %395 = vmatpush1.bf16.msra.mxu0 0
      %396 = vmatprep.subr.bf16.mxu0 0
      %397 = vmatpush1.bf16.msra.mxu0 0
      %398 = vmatprep.mubr.bf16.mxu0 0
      %399 = vmatmul.mubr.bf16.gmra.mrb[0].mxu0 %v361
      %v400 = vpop.f32.mrb[0].mxu0
      %v401 = vadd.f32 %v351, %v400
      %v402 = vpop.f32.mrb[0].mxu0
      %v403 = vpop.f32.mrb[0].mxu0
      %v404 = vadd.f32 %v354, %v403
      %v405 = vpop.f32.mrb[0].mxu0
      %406 = vdwg.mxu0
      %v407 = vld [vmem:[#allocation2] sm:$0xc]
      %v408 = vld [vmem:[#allocation2 + $0x8] sm:$0x3]
      %s409 = scalar_lea.vmem %s2, 4
      %v410 = vld [vmem:[%s409] sm:$0x3]
      %v413 = vunpack.c.l.b16 %v407
      %v414 = vunpack.c.l.b16 %v408
      %v415 = vpack.c.b16 %v300, %v413
      %v416 = vpack.c.b16 %v414, %v414
      %vm417 = vcmask 1045504
      %v418 = vrot.slane %v415, 2
      %v419 = vrot.slane %v416, 2
      %v420 = vsel %vm417, %v418, %v419
      %v422 = vsel %vm308, %v420, 0
      %v425 = vsel %vm312, %v410, 0
      %427 = vmatprep.subr.bf16.mxu0 0
      %428 = vmatpush1.bf16.msra.mxu0 %v425
      %429 = vmatprep.subr.bf16.mxu0 0
      %430 = vmatpush1.bf16.msra.mxu0 0
      %431 = vmatprep.subr.bf16.mxu0 0
      %432 = vmatpush1.bf16.msra.mxu0 0
      %433 = vmatprep.subr.bf16.mxu0 0
      %434 = vmatpush1.bf16.msra.mxu0 0
      %435 = vmatprep.subr.bf16.mxu0 0
      %436 = vmatpush1.bf16.msra.mxu0 0
      %437 = vmatprep.subr.bf16.mxu0 0
      %438 = vmatpush1.bf16.msra.mxu0 0
      %439 = vmatprep.subr.bf16.mxu0 0
      %440 = vmatpush1.bf16.msra.mxu0 0
      %441 = vmatprep.subr.bf16.mxu0 0
      %442 = vmatpush1.bf16.msra.mxu0 0
      %443 = vmatprep.subr.bf16.mxu0 0
      %444 = vmatpush1.bf16.msra.mxu0 0
      %445 = vmatprep.subr.bf16.mxu0 0
      %446 = vmatpush1.bf16.msra.mxu0 0
      %447 = vmatprep.subr.bf16.mxu0 0
      %448 = vmatpush1.bf16.msra.mxu0 0
      %449 = vmatprep.subr.bf16.mxu0 0
      %450 = vmatpush1.bf16.msra.mxu0 0
      %451 = vmatprep.subr.bf16.mxu0 0
      %452 = vmatpush1.bf16.msra.mxu0 0
      %453 = vmatprep.subr.bf16.mxu0 0
      %454 = vmatpush1.bf16.msra.mxu0 0
      %455 = vmatprep.subr.bf16.mxu0 0
      %456 = vmatpush1.bf16.msra.mxu0 0
      %457 = vmatprep.subr.bf16.mxu0 0
      %458 = vmatpush1.bf16.msra.mxu0 0
      %459 = vmatprep.mubr.bf16.mxu0 0
      %460 = vmatmul.mubr.bf16.gmra.mrb[0].mxu0 %v422
      %v461 = vpop.f32.mrb[0].mxu0
      %v462 = vadd.f32 0.0, %v461
      %v463 = vpop.f32.mrb[0].mxu0
      %v464 = vpop.f32.mrb[0].mxu0
      %v465 = vadd.f32 0.0, %v464
      %v466 = vpop.f32.mrb[0].mxu0
      %467 = vdwg.mxu0
      %v468 = vadd.f32 %v401, %v462
      %v469 = vadd.f32 %v404, %v465
      %v470 = vld [vmem:[%s3] sm:$0x1]
      %v472 = vlaneseq
      %v473 = vshrl.u32 %v472, 7
      %v474 = vsub.s32 0, %v473
      %v475 = vrot.slane %v470, %v474
      %v477 = vadd.f32 %v468, %v475
      %v478 = vadd.f32 %v469, %v475
      %vm479 = vcmask 64512
      %480 = vst.msk [vmem:[%s263] sm:$0xff] %vm479, %v477
      %481 = vst.msk [vmem:[%s263 + $0x8] sm:$0xff] %vm479, %v478
      %s482 = smul.u32 2, %s20
      %p483 = scmp.lt.s32.totalorder %s19, 1
      %s484 = scalar_select %p483, %s19, 1
      %p485 = scmp.lt.s32.totalorder %s482, 1
      %s486 = scalar_select %p485, %s482, 1
      %s487 = smul.addr %s484, 2
      %s488 = sadd.s32 %s486, %s487
      %s489 = smul.addr %s488, 8
      %s490 = scalar_lea.vmem %s4, %s489
      // Predicated region
      $region37: #{tpu_custom_call.1} parent=35 // pred_check
        %p491 = pneg %p145
      $region38: #{tpu_custom_call.1} parent=35 // pred_check_branch
        %493 = sbr.rel (%p491) target = $region40
      $region39: #{tpu_custom_call.1} parent=35 // pred_region
        %s494 = smul.u32 2, %s20
      $region40: #{tpu_custom_call.1} parent=35 // pred_fallthru
        _
    $region36: #{tpu_custom_call.1} parent=5 // pred_fallthru
      _
    %p495 = scmp.le.s32.totalorder 2, %s10
    // Predicated region
    $region41: #{tpu_custom_call.1} parent=5 // pred_check
      %p496 = pneg %p495
    $region42: #{tpu_custom_call.1} parent=5 // pred_check_branch
      %498 = sbr.rel (%p496) target = $region44
    $region43: #{tpu_custom_call.1} parent=5 // pred_region
      %s499 = ssub.s32 %s10, 2
      // Predicated region
      $region45: #{tpu_custom_call.1} parent=43 // pred_check
        %p500 = pneg %p151
      $region46: #{tpu_custom_call.1} parent=43 // pred_check_branch
        %502 = sbr.rel (%p500) target = $region48
      $region47: #{tpu_custom_call.1} parent=43 // pred_region
        %s503 = smul.u32 2, %s22
        %p504 = scmp.lt.s32.totalorder %s21, 1
        %s505 = scalar_select %p504, %s21, 1
        %p506 = scmp.lt.s32.totalorder %s503, 1
        %s507 = scalar_select %p506, %s503, 1
        %s508 = smul.addr %s505, 2
        %s509 = sadd.s32 %s507, %s508
        %s510 = smul.addr %s509, 8
        %s511 = scalar_lea.vmem %s4, %s510
      $region48: #{tpu_custom_call.1} parent=43 // pred_fallthru
        _
    $region44: #{tpu_custom_call.1} parent=5 // pred_fallthru
      _
  $region6: #{tpu_custom_call.1} parent=0 // loop_footer
    %s14 = sadd.s32 1, %s10
  $region7: #{tpu_custom_call.1} parent=0 // loop_footer_branch
    %9 = sbr.rel target = $region3
  $region8: #{tpu_custom_call.1} parent=0 // loop_exit
    _

</llo_original>
